<compile_context>
chip_gen: v6e
topology: v6e:2x2x1
jax: 0.10.0
libtpu: 0.0.40
codegen_flags: <defaults>
</compile_context>

<pallas_src>
import functools

import jax
import jax.numpy as jnp
from jax.experimental import pallas as pl
from jax.experimental.pallas import tpu as pltpu


_LANE = 128                            # lane granularity (last dim)
_SUBLANE = 8                           # sublane granularity (2nd-to-last dim)
_TARGET_TILE_BYTES = 4 * 1024 * 1024   # in+out bytes per grid step
_MAX_OUT_LANES = 2048                  # target output-lane width per tile


def _upsample_kernel(x_ref, o_ref, *, scale: int):
    # x_ref: (TR, TL) VMEM tile; o_ref: (TR, TL * scale) VMEM tile.
    x = x_ref[...]
    tr, tl = x.shape
    # Nearest-neighbour repeat along lanes:
    #   out[r, scale * i + k] = x[r, i]   for k in [0, scale)
    y = jnp.broadcast_to(x[:, :, None], (tr, tl, scale))
    o_ref[...] = y.reshape(tr, tl * scale)


def _pick_tile(dim: int, unit: int, cap: int) -> int:
    """Largest multiple of `unit` that divides `dim` and is <= cap.

    Falls back to the full dimension when `dim` is not a multiple of `unit`
    (full-extent blocks are always legal), so no remainder/masked tiles exist.
    """
    if dim % unit != 0:
        return dim
    best = unit
    m = unit
    limit = min(dim, max(cap, unit))
    while m <= limit:
        if dim % m == 0:
            best = m
        m += unit
    return best


def upsample_nearest_1d(x: jax.Array, scale_factor: int = 2) -> jax.Array:
    """Pallas TPU nearest-neighbour upsample along the last axis of (N, C, L)."""
    if int(scale_factor) != scale_factor or scale_factor < 1:
        raise ValueError("only positive integer scale factors are supported")
    scale = int(scale_factor)

    n, c, l = x.shape
    out_l = l * scale
    rows = n * c
    itemsize = jnp.dtype(x.dtype).itemsize

    # Length tile: multiple of 128 lanes, capped so the OUTPUT tile is <= 2048 lanes.
    tl = _pick_tile(l, _LANE, max(_LANE, _MAX_OUT_LANES // scale))
    # Row tile: multiple of 8 sublanes, sized so per-step in+out bytes stay in budget.
    bytes_per_row = tl * (1 + scale) * itemsize
    row_cap = max(_SUBLANE, _TARGET_TILE_BYTES // max(bytes_per_row, 1))
    tr = _pick_tile(rows, _SUBLANE, row_cap)

    x2 = x.reshape(rows, l)  # contiguous reshape: no data movement in XLA

    kernel = functools.partial(_upsample_kernel, scale=scale)
    out2 = pl.pallas_call(
        kernel,
        out_shape=jax.ShapeDtypeStruct((rows, out_l), x.dtype),
        grid_spec=pltpu.PrefetchScalarGridSpec(
            num_scalar_prefetch=0,
            grid=(rows // tr, l // tl),
            in_specs=[pl.BlockSpec((tr, tl), lambda r, li: (r, li))],
            out_specs=pl.BlockSpec((tr, tl * scale), lambda r, li: (r, li)),
        ),
        compiler_params=pltpu.CompilerParams(
            dimension_semantics=("parallel", "parallel")),
    )(x2)

    return out2.reshape(n, c, out_l)


if __name__ == "__main__":
    key = jax.random.PRNGKey(0)
    # Shapes consistent with the 1D module: (batch, channels, length).
    shapes = [
        (2, 4, 16),     # tiny demo shape (full-extent block path)
        (2, 16, 512),   # lane-tiled path (TL a multiple of 128)
        (2, 32, 2048),  # multi-step grid (exercises software pipelining)
    ]
    for i, shp in enumerate(shapes):
        k = jax.random.fold_in(key, i)
        x = jax.random.normal(k, shp, dtype=jnp.float32)
        out = jax.block_until_ready(upsample_nearest_1d(x, scale_factor=2))
        ref = jnp.repeat(x, 2, axis=-1)
        assert out.shape == (shp[0], shp[1], shp[2] * 2), out.shape
        assert jnp.array_equal(out, ref), f"mismatch vs nearest reference at {shp}"
    print("KERNEL_OK")
</pallas_src>

<mosaic_0001>
module attributes {stable_mosaic.version = 11 : i64} {
  func.func @_upsample_kernel(%arg0: i32, %arg1: i32, %arg2: memref<8x16xf32, #tpu.memory_space<vmem>>, %arg3: memref<8x32xf32, #tpu.memory_space<vmem>>) attributes {dimension_semantics = [#tpu.dimension_semantics<parallel>, #tpu.dimension_semantics<parallel>], iteration_bounds = array<i64: 1, 1>, scalar_prefetch = 0 : i64, scratch_operands = 0 : i64, tpu.core_type = #tpu.core_type<tc>, window_params = [{transform_indices = @transform_0, window_bounds = array<i64: 8, 16>}, {transform_indices = @transform_1, window_bounds = array<i64: 8, 32>}]} {
    %c0 = arith.constant 0 : index
    %c0_0 = arith.constant 0 : index
    %0 = vector.load %arg2[%c0, %c0_0] : memref<8x16xf32, #tpu.memory_space<vmem>>, vector<8x16xf32>
    %1 = vector.shape_cast %0 : vector<8x16xf32> to vector<8x16x1xf32>
    %2 = vector.shape_cast %1 : vector<8x16x1xf32> to vector<8x16x1xf32>
    %3 = vector.broadcast %2 : vector<8x16x1xf32> to vector<8x16x2xf32>
    %4 = vector.shape_cast %3 : vector<8x16x2xf32> to vector<8x32xf32>
    %c0_1 = arith.constant 0 : index
    %c0_2 = arith.constant 0 : index
    %5 = vector.load %arg3[%c0_1, %c0_2] : memref<8x32xf32, #tpu.memory_space<vmem>>, vector<8x32xf32>
    tpu.vector_store %arg3[%c0_1, %c0_2], %4 {strides = array<i32>} : memref<8x32xf32, #tpu.memory_space<vmem>>, vector<8x32xf32>,
    return
  }
  func.func @transform_0(%arg0: i32, %arg1: i32) -> (i32, i32) {
    %c0_i32 = arith.constant 0 : i32
    return %arg0, %arg1 : i32, i32
  }
  func.func @transform_1(%arg0: i32, %arg1: i32) -> (i32, i32) {
    %c0_i32 = arith.constant 0 : i32
    return %arg0, %arg1 : i32, i32
  }
}

</mosaic_0001>

<llo_original>
// kernel: tpu_custom_call.1
$region0: #{tpu_custom_call.1}
  #allocation0 [shape = 'u32[]', space=smem, size = 0x4, offset = 0x4, fixed_abs, tag = 'smem constant byte address 0x4 - core index']
  #allocation1 [shape = 'u32[144,128]{1,0:T(1,128)}', space=vmem, size = 0x12000, scoped, tag = 'internal scratch']
  %s0 = inlined_call_operand.hbm [shape: f32[8,16], index: 0, kind: input, shape index: {}]
  %s1 = inlined_call_operand.hbm [shape: f32[8,32], index: 1, kind: output, shape index: {}]
  %s2 = sld [smem:[#allocation0]]
  $region18: #{tpu_custom_call.1} parent=0
    _
  %s4 = ssub.s32 1, %s2
  %s5 = scalar_select 0, %s4, %s2
  $region1: #{tpu_custom_call.1} parent=0
    #allocation2 [shape = 'u8[4096]{0}', space=vmem, size = 0x1000, scoped, tag = 'input window, operand 0, single buffered']
    #allocation3 [shape = 's32[1]{0}', space=sflag, size = 0x4, scoped, tag = 'scoped memory for tpu_custom_call.1']
    #allocation4 [shape = 's32[1]{0}', space=sflag, size = 0x4, scoped, tag = 'scoped memory for tpu_custom_call.1']
    #allocation5 [shape = 'u8[4096]{0}', space=vmem, size = 0x1000, scoped, tag = 'output window, operand 0, single buffered']
    %6 = vsyncpa [#allocation3], 0
    %7 = vsyncpa [#allocation4], 0
    // Predicated region
    $region2: #{tpu_custom_call.1} parent=1 // pred_check
      _
    $region3: #{tpu_custom_call.1} parent=1 // pred_check_branch
      %9 = sbr.rel (0) target = $region5
    $region4: #{tpu_custom_call.1} parent=1 // pred_region
      %s11 = ssub.s32 128, 128
      %12 = vsyncadd [#allocation3], %s11
      %s14 = sshll.u32 [#allocation2], 4
      %s15 = int_to_ptr.vmem [resolvable:$true] %s14
      %17 = dma.hbm_to_vmem [thread:$0]  %s0, 128, %s15, [#allocation3]
    $region5: #{tpu_custom_call.1} parent=1 // pred_fallthru
      _
    // Predicated region
    $region6: #{tpu_custom_call.1} parent=1 // pred_check
      _
    $region7: #{tpu_custom_call.1} parent=1 // pred_check_branch
      %19 = sbr.rel (0) target = $region9
    $region8: #{tpu_custom_call.1} parent=1 // pred_region
      %20 = dma.done [#allocation3], 128
    $region9: #{tpu_custom_call.1} parent=1 // pred_fallthru
      _
    %v21 = vld [vmem:[#allocation2] sm:$0xff]
    %v22 = vlaneseq
    %v23 = vshrl.u32 %v22, 7
    %v24 = vsub.s32 0, %v23
    %v25 = vrot.slane %v21, %v24
    %27 = vbcast.lane.b32.xlu0 %v25, 256
    %v28 = vpop.permute.xlu0 %27
    %s30 = sor.u32 256, 8
    %31 = vbcast.lane.b32.xlu0 %v25, %s30
    %v32 = vpop.permute.xlu0 %31
    %v33 = vlaneseq
    %v34 = vshrl.u32 %v33, 7
    %v35 = vsub.s32 1, %v34
    %v36 = vrot.slane %v21, %v35
    %38 = vbcast.lane.b32.xlu0 %v36, 256
    %v39 = vpop.permute.xlu0 %38
    %s41 = sor.u32 256, 8
    %42 = vbcast.lane.b32.xlu0 %v36, %s41
    %v43 = vpop.permute.xlu0 %42
    %v44 = vlaneseq
    %v45 = vshrl.u32 %v44, 7
    %v46 = vsub.s32 2, %v45
    %v47 = vrot.slane %v21, %v46
    %49 = vbcast.lane.b32.xlu0 %v47, 256
    %v50 = vpop.permute.xlu0 %49
    %s52 = sor.u32 256, 8
    %53 = vbcast.lane.b32.xlu0 %v47, %s52
    %v54 = vpop.permute.xlu0 %53
    %v55 = vlaneseq
    %v56 = vshrl.u32 %v55, 7
    %v57 = vsub.s32 3, %v56
    %v58 = vrot.slane %v21, %v57
    %60 = vbcast.lane.b32.xlu0 %v58, 256
    %v61 = vpop.permute.xlu0 %60
    %s63 = sor.u32 256, 8
    %64 = vbcast.lane.b32.xlu0 %v58, %s63
    %v65 = vpop.permute.xlu0 %64
    %v66 = vlaneseq
    %v67 = vshrl.u32 %v66, 7
    %v68 = vsub.s32 4, %v67
    %v69 = vrot.slane %v21, %v68
    %71 = vbcast.lane.b32.xlu0 %v69, 256
    %v72 = vpop.permute.xlu0 %71
    %s74 = sor.u32 256, 8
    %75 = vbcast.lane.b32.xlu0 %v69, %s74
    %v76 = vpop.permute.xlu0 %75
    %v77 = vlaneseq
    %v78 = vshrl.u32 %v77, 7
    %v79 = vsub.s32 5, %v78
    %v80 = vrot.slane %v21, %v79
    %82 = vbcast.lane.b32.xlu0 %v80, 256
    %v83 = vpop.permute.xlu0 %82
    %s85 = sor.u32 256, 8
    %86 = vbcast.lane.b32.xlu0 %v80, %s85
    %v87 = vpop.permute.xlu0 %86
    %v88 = vlaneseq
    %v89 = vshrl.u32 %v88, 7
    %v90 = vsub.s32 6, %v89
    %v91 = vrot.slane %v21, %v90
    %93 = vbcast.lane.b32.xlu0 %v91, 256
    %v94 = vpop.permute.xlu0 %93
    %s96 = sor.u32 256, 8
    %97 = vbcast.lane.b32.xlu0 %v91, %s96
    %v98 = vpop.permute.xlu0 %97
    %v99 = vlaneseq
    %v100 = vshrl.u32 %v99, 7
    %v101 = vsub.s32 7, %v100
    %v102 = vrot.slane %v21, %v101
    %104 = vbcast.lane.b32.xlu0 %v102, 256
    %v105 = vpop.permute.xlu0 %104
    %s107 = sor.u32 256, 8
    %108 = vbcast.lane.b32.xlu0 %v102, %s107
    %v109 = vpop.permute.xlu0 %108
    %v110 = vcombine.low %v28, %v50
    %v111 = vcombine.high %v28, %v50
    %v113 = vunpack.c.l.s4 1983009808
    %v114 = vunpack.c.0.s8 %v113
    %v115 = vlaneseq
    %v116 = vshrl.u32 %v115, 7
    %v117 = vsub.s32 %v114, %v116
    %v118 = vrot.slane %v110, %v117
    %v120 = vunpack.c.l.s4 1983009808
    %v121 = vunpack.c.0.s8 %v120
    %v122 = vlaneseq
    %v123 = vshrl.u32 %v122, 7
    %v124 = vsub.s32 %v121, %v123
    %v125 = vrot.slane %v111, %v124
    %v126 = vcombine.low %v39, %v61
    %v127 = vcombine.high %v39, %v61
    %v129 = vunpack.c.l.s4 1983009808
    %v130 = vunpack.c.0.s8 %v129
    %v131 = vlaneseq
    %v132 = vshrl.u32 %v131, 7
    %v133 = vsub.s32 %v130, %v132
    %v134 = vrot.slane %v126, %v133
    %v136 = vunpack.c.l.s4 1983009808
    %v137 = vunpack.c.0.s8 %v136
    %v138 = vlaneseq
    %v139 = vshrl.u32 %v138, 7
    %v140 = vsub.s32 %v137, %v139
    %v141 = vrot.slane %v127, %v140
    %v142 = vcombine.low %v72, %v94
    %v143 = vcombine.high %v72, %v94
    %v145 = vunpack.c.l.s4 1983009808
    %v146 = vunpack.c.0.s8 %v145
    %v147 = vlaneseq
    %v148 = vshrl.u32 %v147, 7
    %v149 = vsub.s32 %v146, %v148
    %v150 = vrot.slane %v142, %v149
    %v152 = vunpack.c.l.s4 1983009808
    %v153 = vunpack.c.0.s8 %v152
    %v154 = vlaneseq
    %v155 = vshrl.u32 %v154, 7
    %v156 = vsub.s32 %v153, %v155
    %v157 = vrot.slane %v143, %v156
    %v158 = vcombine.low %v83, %v105
    %v159 = vcombine.high %v83, %v105
    %v161 = vunpack.c.l.s4 1983009808
    %v162 = vunpack.c.0.s8 %v161
    %v163 = vlaneseq
    %v164 = vshrl.u32 %v163, 7
    %v165 = vsub.s32 %v162, %v164
    %v166 = vrot.slane %v158, %v165
    %v168 = vunpack.c.l.s4 1983009808
    %v169 = vunpack.c.0.s8 %v168
    %v170 = vlaneseq
    %v171 = vshrl.u32 %v170, 7
    %v172 = vsub.s32 %v169, %v171
    %v173 = vrot.slane %v159, %v172
    %v174 = vcombine.low %v118, %v134
    %v175 = vcombine.high %v118, %v134
    %v177 = vunpack.c.l.s4 1934713408
    %v178 = vunpack.c.0.s8 %v177
    %v179 = vlaneseq
    %v180 = vshrl.u32 %v179, 7
    %v181 = vsub.s32 %v178, %v180
    %v182 = vrot.slane %v174, %v181
    %v184 = vunpack.c.l.s4 1934713408
    %v185 = vunpack.c.0.s8 %v184
    %v186 = vlaneseq
    %v187 = vshrl.u32 %v186, 7
    %v188 = vsub.s32 %v185, %v187
    %v189 = vrot.slane %v175, %v188
    %v190 = vcombine.low %v125, %v141
    %v191 = vcombine.high %v125, %v141
    %v193 = vunpack.c.l.s4 1934713408
    %v194 = vunpack.c.0.s8 %v193
    %v195 = vlaneseq
    %v196 = vshrl.u32 %v195, 7
    %v197 = vsub.s32 %v194, %v196
    %v198 = vrot.slane %v190, %v197
    %v200 = vunpack.c.l.s4 1934713408
    %v201 = vunpack.c.0.s8 %v200
    %v202 = vlaneseq
    %v203 = vshrl.u32 %v202, 7
    %v204 = vsub.s32 %v201, %v203
    %v205 = vrot.slane %v191, %v204
    %v206 = vcombine.low %v150, %v166
    %v207 = vcombine.high %v150, %v166
    %v209 = vunpack.c.l.s4 1934713408
    %v210 = vunpack.c.0.s8 %v209
    %v211 = vlaneseq
    %v212 = vshrl.u32 %v211, 7
    %v213 = vsub.s32 %v210, %v212
    %v214 = vrot.slane %v206, %v213
    %v216 = vunpack.c.l.s4 1934713408
    %v217 = vunpack.c.0.s8 %v216
    %v218 = vlaneseq
    %v219 = vshrl.u32 %v218, 7
    %v220 = vsub.s32 %v217, %v219
    %v221 = vrot.slane %v207, %v220
    %v222 = vcombine.low %v157, %v173
    %v223 = vcombine.high %v157, %v173
    %v225 = vunpack.c.l.s4 1934713408
    %v226 = vunpack.c.0.s8 %v225
    %v227 = vlaneseq
    %v228 = vshrl.u32 %v227, 7
    %v229 = vsub.s32 %v226, %v228
    %v230 = vrot.slane %v222, %v229
    %v232 = vunpack.c.l.s4 1934713408
    %v233 = vunpack.c.0.s8 %v232
    %v234 = vlaneseq
    %v235 = vshrl.u32 %v234, 7
    %v236 = vsub.s32 %v233, %v235
    %v237 = vrot.slane %v223, %v236
    %v238 = vcombine.low %v182, %v214
    %v239 = vcombine.high %v182, %v214
    %v240 = vcombine.low %v189, %v221
    %v241 = vcombine.high %v189, %v221
    %v242 = vcombine.low %v198, %v230
    %v243 = vcombine.high %v198, %v230
    %v244 = vcombine.low %v205, %v237
    %v245 = vcombine.high %v205, %v237
    %v246 = vcombine.low %v32, %v54
    %v247 = vcombine.high %v32, %v54
    %v249 = vunpack.c.l.s4 1983009808
    %v250 = vunpack.c.0.s8 %v249
    %v251 = vlaneseq
    %v252 = vshrl.u32 %v251, 7
    %v253 = vsub.s32 %v250, %v252
    %v254 = vrot.slane %v246, %v253
    %v256 = vunpack.c.l.s4 1983009808
    %v257 = vunpack.c.0.s8 %v256
    %v258 = vlaneseq
    %v259 = vshrl.u32 %v258, 7
    %v260 = vsub.s32 %v257, %v259
    %v261 = vrot.slane %v247, %v260
    %v262 = vcombine.low %v43, %v65
    %v263 = vcombine.high %v43, %v65
    %v265 = vunpack.c.l.s4 1983009808
    %v266 = vunpack.c.0.s8 %v265
    %v267 = vlaneseq
    %v268 = vshrl.u32 %v267, 7
    %v269 = vsub.s32 %v266, %v268
    %v270 = vrot.slane %v262, %v269
    %v272 = vunpack.c.l.s4 1983009808
    %v273 = vunpack.c.0.s8 %v272
    %v274 = vlaneseq
    %v275 = vshrl.u32 %v274, 7
    %v276 = vsub.s32 %v273, %v275
    %v277 = vrot.slane %v263, %v276
    %v278 = vcombine.low %v76, %v98
    %v279 = vcombine.high %v76, %v98
    %v281 = vunpack.c.l.s4 1983009808
    %v282 = vunpack.c.0.s8 %v281
    %v283 = vlaneseq
    %v284 = vshrl.u32 %v283, 7
    %v285 = vsub.s32 %v282, %v284
    %v286 = vrot.slane %v278, %v285
    %v288 = vunpack.c.l.s4 1983009808
    %v289 = vunpack.c.0.s8 %v288
    %v290 = vlaneseq
    %v291 = vshrl.u32 %v290, 7
    %v292 = vsub.s32 %v289, %v291
    %v293 = vrot.slane %v279, %v292
    %v294 = vcombine.low %v87, %v109
    %v295 = vcombine.high %v87, %v109
    %v297 = vunpack.c.l.s4 1983009808
    %v298 = vunpack.c.0.s8 %v297
    %v299 = vlaneseq
    %v300 = vshrl.u32 %v299, 7
    %v301 = vsub.s32 %v298, %v300
    %v302 = vrot.slane %v294, %v301
    %v304 = vunpack.c.l.s4 1983009808
    %v305 = vunpack.c.0.s8 %v304
    %v306 = vlaneseq
    %v307 = vshrl.u32 %v306, 7
    %v308 = vsub.s32 %v305, %v307
    %v309 = vrot.slane %v295, %v308
    %v310 = vcombine.low %v254, %v270
    %v311 = vcombine.high %v254, %v270
    %v313 = vunpack.c.l.s4 1934713408
    %v314 = vunpack.c.0.s8 %v313
    %v315 = vlaneseq
    %v316 = vshrl.u32 %v315, 7
    %v317 = vsub.s32 %v314, %v316
    %v318 = vrot.slane %v310, %v317
    %v320 = vunpack.c.l.s4 1934713408
    %v321 = vunpack.c.0.s8 %v320
    %v322 = vlaneseq
    %v323 = vshrl.u32 %v322, 7
    %v324 = vsub.s32 %v321, %v323
    %v325 = vrot.slane %v311, %v324
    %v326 = vcombine.low %v261, %v277
    %v327 = vcombine.high %v261, %v277
    %v329 = vunpack.c.l.s4 1934713408
    %v330 = vunpack.c.0.s8 %v329
    %v331 = vlaneseq
    %v332 = vshrl.u32 %v331, 7
    %v333 = vsub.s32 %v330, %v332
    %v334 = vrot.slane %v326, %v333
    %v336 = vunpack.c.l.s4 1934713408
    %v337 = vunpack.c.0.s8 %v336
    %v338 = vlaneseq
    %v339 = vshrl.u32 %v338, 7
    %v340 = vsub.s32 %v337, %v339
    %v341 = vrot.slane %v327, %v340
    %v342 = vcombine.low %v286, %v302
    %v343 = vcombine.high %v286, %v302
    %v345 = vunpack.c.l.s4 1934713408
    %v346 = vunpack.c.0.s8 %v345
    %v347 = vlaneseq
    %v348 = vshrl.u32 %v347, 7
    %v349 = vsub.s32 %v346, %v348
    %v350 = vrot.slane %v342, %v349
    %v352 = vunpack.c.l.s4 1934713408
    %v353 = vunpack.c.0.s8 %v352
    %v354 = vlaneseq
    %v355 = vshrl.u32 %v354, 7
    %v356 = vsub.s32 %v353, %v355
    %v357 = vrot.slane %v343, %v356
    %v358 = vcombine.low %v293, %v309
    %v359 = vcombine.high %v293, %v309
    %v361 = vunpack.c.l.s4 1934713408
    %v362 = vunpack.c.0.s8 %v361
    %v363 = vlaneseq
    %v364 = vshrl.u32 %v363, 7
    %v365 = vsub.s32 %v362, %v364
    %v366 = vrot.slane %v358, %v365
    %v368 = vunpack.c.l.s4 1934713408
    %v369 = vunpack.c.0.s8 %v368
    %v370 = vlaneseq
    %v371 = vshrl.u32 %v370, 7
    %v372 = vsub.s32 %v369, %v371
    %v373 = vrot.slane %v359, %v372
    %v374 = vcombine.low %v318, %v350
    %v375 = vcombine.high %v318, %v350
    %v376 = vcombine.low %v325, %v357
    %v377 = vcombine.high %v325, %v357
    %v378 = vcombine.low %v334, %v366
    %v379 = vcombine.high %v334, %v366
    %v380 = vcombine.low %v341, %v373
    %v381 = vcombine.high %v341, %v373
    %383 = vrot.lane.b32.xlu0 %v239, 2
    %v384 = vpop.permute.xlu0 %383
    %387 = vrot.lane.b32.xlu0 %v240, 4
    %v388 = vpop.permute.xlu0 %387
    %391 = vrot.lane.b32.xlu0 %v241, 6
    %v392 = vpop.permute.xlu0 %391
    %395 = vrot.lane.b32.xlu0 %v242, 8
    %v396 = vpop.permute.xlu0 %395
    %399 = vrot.lane.b32.xlu0 %v243, 10
    %v400 = vpop.permute.xlu0 %399
    %403 = vrot.lane.b32.xlu0 %v244, 12
    %v404 = vpop.permute.xlu0 %403
    %407 = vrot.lane.b32.xlu0 %v245, 14
    %v408 = vpop.permute.xlu0 %407
    %411 = vrot.lane.b32.xlu0 %v374, 16
    %v412 = vpop.permute.xlu0 %411
    %415 = vrot.lane.b32.xlu0 %v375, 18
    %v416 = vpop.permute.xlu0 %415
    %419 = vrot.lane.b32.xlu0 %v376, 20
    %v420 = vpop.permute.xlu0 %419
    %423 = vrot.lane.b32.xlu0 %v377, 22
    %v424 = vpop.permute.xlu0 %423
    %427 = vrot.lane.b32.xlu0 %v378, 24
    %v428 = vpop.permute.xlu0 %427
    %431 = vrot.lane.b32.xlu0 %v379, 26
    %v432 = vpop.permute.xlu0 %431
    %435 = vrot.lane.b32.xlu0 %v380, 28
    %v436 = vpop.permute.xlu0 %435
    %439 = vrot.lane.b32.xlu0 %v381, 30
    %v440 = vpop.permute.xlu0 %439
    %vm442 = vcmask 15360
    %v443 = vsel %vm442, %v238, %v384
    %vm444 = vcmask 31744
    %v445 = vsel %vm444, %v443, %v388
    %vm446 = vcmask 48128
    %v447 = vsel %vm446, %v445, %v392
    %vm448 = vcmask 64512
    %v449 = vsel %vm448, %v447, %v396
    %vm450 = vcmask 80896
    %v451 = vsel %vm450, %v449, %v400
    %vm452 = vcmask 97280
    %v453 = vsel %vm452, %v451, %v404
    %vm454 = vcmask 113664
    %v455 = vsel %vm454, %v453, %v408
    %vm456 = vcmask 130048
    %v457 = vsel %vm456, %v455, %v412
    %vm458 = vcmask 146432
    %v459 = vsel %vm458, %v457, %v416
    %vm460 = vcmask 162816
    %v461 = vsel %vm460, %v459, %v420
    %vm462 = vcmask 179200
    %v463 = vsel %vm462, %v461, %v424
    %vm464 = vcmask 195584
    %v465 = vsel %vm464, %v463, %v428
    %vm466 = vcmask 211968
    %v467 = vsel %vm466, %v465, %v432
    %vm468 = vcmask 228352
    %v469 = vsel %vm468, %v467, %v436
    %vm470 = vcmask 244736
    %v471 = vsel %vm470, %v469, %v440
    %vm472 = vcmask 261120
    %473 = vst.msk [vmem:[#allocation5] sm:$0xff] %vm472, %v471
    // Predicated region
    $region10: #{tpu_custom_call.1} parent=1 // pred_check
      _
    $region11: #{tpu_custom_call.1} parent=1 // pred_check_branch
      %475 = sbr.rel (0) target = $region13
    $region12: #{tpu_custom_call.1} parent=1 // pred_region
      %s477 = ssub.s32 128, 128
      %478 = vsyncadd [#allocation4], %s477
      %s480 = sshll.u32 [#allocation5], 4
      %s481 = int_to_ptr.vmem [resolvable:$true] %s480
      %483 = dma.vmem_to_hbm [thread:$0]  %s481, 128, %s1, [#allocation4]
    $region13: #{tpu_custom_call.1} parent=1 // pred_fallthru
      _
    // Predicated region
    $region14: #{tpu_custom_call.1} parent=1 // pred_check
      _
    $region15: #{tpu_custom_call.1} parent=1 // pred_check_branch
      %485 = sbr.rel (0) target = $region17
    $region16: #{tpu_custom_call.1} parent=1 // pred_region
      %486 = dma.done [#allocation4], 128
    $region17: #{tpu_custom_call.1} parent=1 // pred_fallthru
      _
    %487 = vsyncpa [#allocation3], 1
    %488 = vsyncpa [#allocation4], 1

</llo_original>
